<compile_context>
chip_gen: v5e
topology: v5e:2x2
jax: 0.10.0
libtpu: 0.0.40
codegen_flags: <defaults>
</compile_context>

<pallas_src>
import jax
import jax.numpy as jnp
from jax.experimental import pallas as pl
from jax.experimental.pallas import tpu as pltpu


def _round_up(n: int, m: int) -> int:
    return ((n + m - 1) // m) * m


def simplenet_kernel(x_ref, w1_ref, b1_ref, w2_ref, b2_ref, w3_ref, b3_ref, o_ref):
    """One batch tile (feature-major): relu(fc1) -> relu(fc2) -> fc3."""
    x = x_ref[...]                                        # (3, TILE_B) f32
    w1 = w1_ref[...]                                      # (64, 3)     f32

    # ---- fc1 + ReLU on the VPU: K=3 as three broadcast FMAs (skip the MXU) ----
    # Broadcasts of the w1 columns / x rows are hoisted (one each per grid step).
    h1 = (w1[:, 0:1] * x[0:1, :]
          + w1[:, 1:2] * x[1:2, :]
          + w1[:, 2:3] * x[2:3, :]
          + b1_ref[...])                                  # (64, TILE_B) f32
    h1 = jnp.maximum(h1, 0.0)

    # ---- fc2 + ReLU on the MXU: bf16 operands, f32 accumulation ----
    # Output is (64, TILE_B): batch on the MXU N axis -> high occupancy.
    h2 = jnp.dot(w2_ref[...], h1.astype(jnp.bfloat16),
                 preferred_element_type=jnp.float32)      # (64, TILE_B) f32
    h2 = jnp.maximum(h2 + b2_ref[...], 0.0)

    # ---- fc3 (N=1) on the VPU/XLU: multiply + sublane reduction (skip the MXU) ----
    out = jnp.sum(h2 * w3_ref[...], axis=0, keepdims=True) + b3_ref[0]
    o_ref[...] = out                                      # (1, TILE_B) f32, lane-dense


def simplenet_forward(x, params, *, tile_b=2048):
    """x: (B, 3) f32 -> (B, 1) f32."""
    w1, b1, w2, b2, w3, b3 = params
    B = x.shape[0]

    # Lane-dense batch tile: multiple of 128 on the lane axis.
    tile_b = max(128, _round_up(tile_b, 128))
    tile_b = min(tile_b, _round_up(B, 128))
    if B >= 256:
        # Guarantee >=2 grid steps so v7x's 2 TensorCores both get work.
        tile_b = min(tile_b, _round_up(-(-B // 2), 128))
    pad_b = _round_up(B, tile_b)

    # Feature-major input: (3, pad_b), batch on the lane axis.
    xt = jnp.transpose(x)                                 # (3, B)
    if pad_b != B:
        xt = jnp.pad(xt, ((0, 0), (0, pad_b - B)))
    grid = (pad_b // tile_b,)

    # bf16 weights for the MXU matmul (accumulation stays f32 in-kernel).
    w2_bf16 = w2.astype(jnp.bfloat16)

    resident = lambda i: (0, 0)   # weights/biases: same block every step -> stay resident

    out = pl.pallas_call(
        simplenet_kernel,
        out_shape=jax.ShapeDtypeStruct((1, pad_b), jnp.float32),
        grid=grid,
        in_specs=[
            pl.BlockSpec((3, tile_b), lambda i: (0, i)),   # x: (3, tile_b) per step
            pl.BlockSpec((64, 3), resident),               # w1 (out, in) f32
            pl.BlockSpec((64, 1), resident),               # b1 column
            pl.BlockSpec((64, 64), resident),              # w2 (out, in) bf16
            pl.BlockSpec((64, 1), resident),               # b2 column
            pl.BlockSpec((64, 1), resident),               # w3 column
            pl.BlockSpec(memory_space=pltpu.MemorySpace.SMEM),  # b3 scalar in SMEM
        ],
        out_specs=pl.BlockSpec((1, tile_b), lambda i: (0, i)),  # lane-dense output slab
        compiler_params=pltpu.CompilerParams(
            dimension_semantics=("parallel",),             # shard batch across TCs (v7x)
        ),
    )(xt, w1, b1, w2_bf16, b2, w3, b3)

    # Drop padded tail columns and restore (B, 1) layout.
    return out[:, :B].reshape(B, 1)


def init_params(key):
    """Deterministic init mimicking torch.nn.Linear (uniform +/- 1/sqrt(fan_in)).

    Weights are stored [out, in] like PyTorch; biases as (out, 1) columns for
    clean lane-broadcast in the feature-major kernel; b3 is a (1,) scalar.
    """
    def linear(key, fan_in, fan_out):
        kw, kb = jax.random.split(key)
        bound = 1.0 / jnp.sqrt(fan_in)
        w = jax.random.uniform(kw, (fan_out, fan_in), jnp.float32, -bound, bound)
        b = jax.random.uniform(kb, (fan_out, 1), jnp.float32, -bound, bound)
        return w, b

    k1, k2, k3 = jax.random.split(key, 3)
    w1, b1 = linear(k1, 3, 64)          # (64, 3), (64, 1)
    w2, b2 = linear(k2, 64, 64)         # (64, 64), (64, 1)
    w3_row, b3_col = linear(k3, 64, 1)  # (1, 64), (1, 1)
    w3 = w3_row.reshape(64, 1)          # column layout for the in-kernel sublane reduce
    b3 = b3_col.reshape(1,)             # scalar for SMEM
    return (w1, b1, w2, b2, w3, b3)


def reference_forward(x, params):
    """Pure-JAX f32 reference matching the PyTorch module semantics."""
    w1, b1, w2, b2, w3, b3 = params
    h1 = jnp.maximum(x @ w1.T + b1.T, 0.0)    # (B, 64)
    h2 = jnp.maximum(h1 @ w2.T + b2.T, 0.0)   # (B, 64)
    return h2 @ w3 + b3                       # (B, 1)


if __name__ == "__main__":
    key = jax.random.PRNGKey(0)
    k_params, k_x1, k_x2 = jax.random.split(key, 3)
    params = init_params(k_params)

    # Small-shape check (single grid step).
    batch = 8
    x = jax.random.normal(k_x1, (batch, 3), dtype=jnp.float32)
    out = jax.block_until_ready(simplenet_forward(x, params))
    ref = reference_forward(x, params)
    assert out.shape == (batch, 1), out.shape
    # bf16 matmul operands (f32 accumulation) -> relaxed tolerance vs f32 reference.
    assert jnp.allclose(out, ref, atol=2e-2, rtol=2e-2), "mismatch vs reference (batch=8)"

    # Multi-step grid + ragged-batch padding check (2 grid steps, padded tail).
    batch2 = 200
    x2 = jax.random.normal(k_x2, (batch2, 3), dtype=jnp.float32)
    out2 = jax.block_until_ready(simplenet_forward(x2, params, tile_b=128))
    ref2 = reference_forward(x2, params)
    assert out2.shape == (batch2, 1), out2.shape
    assert jnp.allclose(out2, ref2, atol=2e-2, rtol=2e-2), "mismatch vs reference (batch=200)"

    print("KERNEL_OK")
</pallas_src>

<mosaic_0001>
module attributes {stable_mosaic.version = 11 : i64} {
  func.func @simplenet_kernel(%arg0: i32, %arg1: memref<3x128xf32, #tpu.memory_space<vmem>>, %arg2: memref<64x3xf32, #tpu.memory_space<vmem>>, %arg3: memref<64x1xf32, #tpu.memory_space<vmem>>, %arg4: memref<64x64xbf16, #tpu.memory_space<vmem>>, %arg5: memref<64x1xf32, #tpu.memory_space<vmem>>, %arg6: memref<64x1xf32, #tpu.memory_space<vmem>>, %arg7: memref<1xf32, #tpu.memory_space<smem>>, %arg8: memref<1x128xf32, #tpu.memory_space<vmem>>) attributes {dimension_semantics = [#tpu.dimension_semantics<parallel>], iteration_bounds = array<i64: 1>, scalar_prefetch = 0 : i64, scratch_operands = 0 : i64, tpu.core_type = #tpu.core_type<tc>, window_params = [{transform_indices = @transform_0, window_bounds = array<i64: 3, 128>}, {pipeline_mode = #tpu.pipeline_mode<synchronous>, transform_indices = @transform_1, window_bounds = array<i64: 64, 3>}, {pipeline_mode = #tpu.pipeline_mode<synchronous>, transform_indices = @transform_2, window_bounds = array<i64: 64, 1>}, {pipeline_mode = #tpu.pipeline_mode<synchronous>, transform_indices = @transform_3, window_bounds = array<i64: 64, 64>}, {pipeline_mode = #tpu.pipeline_mode<synchronous>, transform_indices = @transform_4, window_bounds = array<i64: 64, 1>}, {pipeline_mode = #tpu.pipeline_mode<synchronous>, transform_indices = @transform_5, window_bounds = array<i64: 64, 1>}, {transform_indices = @transform_6, window_bounds = array<i64: 1>}, {transform_indices = @transform_7, window_bounds = array<i64: 1, 128>}]} {
    %c0 = arith.constant 0 : index
    %c0_0 = arith.constant 0 : index
    %0 = vector.load %arg1[%c0, %c0_0] : memref<3x128xf32, #tpu.memory_space<vmem>>, vector<3x128xf32>
    %c0_1 = arith.constant 0 : index
    %c0_2 = arith.constant 0 : index
    %1 = vector.load %arg2[%c0_1, %c0_2] : memref<64x3xf32, #tpu.memory_space<vmem>>, vector<64x3xf32>
    %2 = vector.extract_strided_slice %1 {offsets = [0, 0], sizes = [64, 1], strides = [1, 1]} : vector<64x3xf32> to vector<64x1xf32>
    %3 = vector.extract_strided_slice %0 {offsets = [0, 0], sizes = [1, 128], strides = [1, 1]} : vector<3x128xf32> to vector<1x128xf32>
    %4 = vector.broadcast %2 : vector<64x1xf32> to vector<64x128xf32>
    %5 = vector.broadcast %3 : vector<1x128xf32> to vector<64x128xf32>
    %6 = arith.mulf %4, %5 : vector<64x128xf32>
    %7 = vector.extract_strided_slice %1 {offsets = [0, 1], sizes = [64, 1], strides = [1, 1]} : vector<64x3xf32> to vector<64x1xf32>
    %8 = vector.extract_strided_slice %0 {offsets = [1, 0], sizes = [1, 128], strides = [1, 1]} : vector<3x128xf32> to vector<1x128xf32>
    %9 = vector.broadcast %7 : vector<64x1xf32> to vector<64x128xf32>
    %10 = vector.broadcast %8 : vector<1x128xf32> to vector<64x128xf32>
    %11 = arith.mulf %9, %10 : vector<64x128xf32>
    %12 = arith.addf %6, %11 : vector<64x128xf32>
    %13 = vector.extract_strided_slice %1 {offsets = [0, 2], sizes = [64, 1], strides = [1, 1]} : vector<64x3xf32> to vector<64x1xf32>
    %14 = vector.extract_strided_slice %0 {offsets = [2, 0], sizes = [1, 128], strides = [1, 1]} : vector<3x128xf32> to vector<1x128xf32>
    %15 = vector.broadcast %13 : vector<64x1xf32> to vector<64x128xf32>
    %16 = vector.broadcast %14 : vector<1x128xf32> to vector<64x128xf32>
    %17 = arith.mulf %15, %16 : vector<64x128xf32>
    %18 = arith.addf %12, %17 : vector<64x128xf32>
    %c0_3 = arith.constant 0 : index
    %c0_4 = arith.constant 0 : index
    %19 = vector.load %arg3[%c0_3, %c0_4] : memref<64x1xf32, #tpu.memory_space<vmem>>, vector<64x1xf32>
    %20 = vector.broadcast %19 : vector<64x1xf32> to vector<64x128xf32>
    %21 = arith.addf %18, %20 : vector<64x128xf32>
    %cst = arith.constant 0.000000e+00 : f32
    %22 = vector.broadcast %cst : f32 to vector<64x128xf32>
    %23 = arith.maximumf %21, %22 : vector<64x128xf32>
    %c0_5 = arith.constant 0 : index
    %c0_6 = arith.constant 0 : index
    %24 = vector.load %arg4[%c0_5, %c0_6] : memref<64x64xbf16, #tpu.memory_space<vmem>>, vector<64x64xbf16>
    %25 = arith.truncf %23 : vector<64x128xf32> to vector<64x128xbf16>
    %cst_7 = arith.constant dense<0.000000e+00> : vector<64x128xf32>
    %26 = tpu.matmul %24, %25, %cst_7 {dimension_numbers = #tpu.dot_dimension_numbers<[1], [0], [0], [1], [0, 0, 1, 1], [], []>} : vector<64x64xbf16>, vector<64x128xbf16>, vector<64x128xf32> -> vector<64x128xf32>
    %c0_8 = arith.constant 0 : index
    %c0_9 = arith.constant 0 : index
    %27 = vector.load %arg5[%c0_8, %c0_9] : memref<64x1xf32, #tpu.memory_space<vmem>>, vector<64x1xf32>
    %28 = vector.broadcast %27 : vector<64x1xf32> to vector<64x128xf32>
    %29 = arith.addf %26, %28 : vector<64x128xf32>
    %cst_10 = arith.constant 0.000000e+00 : f32
    %30 = vector.broadcast %cst_10 : f32 to vector<64x128xf32>
    %31 = arith.maximumf %29, %30 : vector<64x128xf32>
    %c0_11 = arith.constant 0 : index
    %c0_12 = arith.constant 0 : index
    %32 = vector.load %arg6[%c0_11, %c0_12] : memref<64x1xf32, #tpu.memory_space<vmem>>, vector<64x1xf32>
    %33 = vector.broadcast %32 : vector<64x1xf32> to vector<64x128xf32>
    %34 = arith.mulf %31, %33 : vector<64x128xf32>
    %cst_13 = arith.constant dense<0.000000e+00> : vector<128xf32>
    %35 = vector.multi_reduction <add>, %34, %cst_13 [0] : vector<64x128xf32> to vector<128xf32>
    %36 = vector.shape_cast %35 : vector<128xf32> to vector<1x128xf32>
    %c0_14 = arith.constant 0 : index
    %37 = memref.load %arg7[%c0_14] : memref<1xf32, #tpu.memory_space<smem>>
    %38 = vector.broadcast %37 : f32 to vector<1x128xf32>
    %39 = arith.addf %36, %38 : vector<1x128xf32>
    %c0_15 = arith.constant 0 : index
    %c0_16 = arith.constant 0 : index
    %40 = vector.load %arg8[%c0_15, %c0_16] : memref<1x128xf32, #tpu.memory_space<vmem>>, vector<1x128xf32>
    tpu.vector_store %arg8[%c0_15, %c0_16], %39 {strides = array<i32>} : memref<1x128xf32, #tpu.memory_space<vmem>>, vector<1x128xf32>,
    return
  }
  func.func @transform_0(%arg0: i32) -> (i32, i32) {
    %c0_i32 = arith.constant 0 : i32
    %c0_i32_0 = arith.constant 0 : i32
    return %c0_i32, %arg0 : i32, i32
  }
  func.func @transform_1(%arg0: i32) -> (i32, i32) {
    %c0_i32 = arith.constant 0 : i32
    %c0_i32_0 = arith.constant 0 : i32
    %c0_i32_1 = arith.constant 0 : i32
    return %c0_i32, %c0_i32_0 : i32, i32
  }
  func.func @transform_2(%arg0: i32) -> (i32, i32) {
    %c0_i32 = arith.constant 0 : i32
    %c0_i32_0 = arith.constant 0 : i32
    %c0_i32_1 = arith.constant 0 : i32
    return %c0_i32, %c0_i32_0 : i32, i32
  }
  func.func @transform_3(%arg0: i32) -> (i32, i32) {
    %c0_i32 = arith.constant 0 : i32
    %c0_i32_0 = arith.constant 0 : i32
    %c0_i32_1 = arith.constant 0 : i32
    return %c0_i32, %c0_i32_0 : i32, i32
  }
  func.func @transform_4(%arg0: i32) -> (i32, i32) {
    %c0_i32 = arith.constant 0 : i32
    %c0_i32_0 = arith.constant 0 : i32
    %c0_i32_1 = arith.constant 0 : i32
    return %c0_i32, %c0_i32_0 : i32, i32
  }
  func.func @transform_5(%arg0: i32) -> (i32, i32) {
    %c0_i32 = arith.constant 0 : i32
    %c0_i32_0 = arith.constant 0 : i32
    %c0_i32_1 = arith.constant 0 : i32
    return %c0_i32, %c0_i32_0 : i32, i32
  }
  func.func @transform_6(%arg0: i32) -> i32 {
    %c0_i32 = arith.constant 0 : i32
    %c0_i32_0 = arith.constant 0 : i32
    return %c0_i32 : i32
  }
  func.func @transform_7(%arg0: i32) -> (i32, i32) {
    %c0_i32 = arith.constant 0 : i32
    %c0_i32_0 = arith.constant 0 : i32
    return %c0_i32, %arg0 : i32, i32
  }
}

</mosaic_0001>

<llo_original>
// kernel: tpu_custom_call.1
$region0: #{tpu_custom_call.1}
  #allocation0 [shape = 'u32[]', space=smem, size = 0x4, offset = 0x4, fixed_abs, tag = 'smem constant byte address 0x4 - core index']
  #allocation1 [shape = 'u32[72,128]{1,0:T(1,128)}', space=vmem, size = 0x9000, scoped, tag = 'internal scratch']
  #allocation2 [shape = 'f32[1]{0:T(128)S(6)}', space=smem, size = 0x200, scoped, tag = 'scoped memory for tpu_custom_call.1']
  %s0 = inlined_call_operand.vmem [shape: f32[3,128], index: 0, kind: input, shape index: {}]
  %s1 = inlined_call_operand.vmem [shape: f32[64,3], index: 1, kind: input, shape index: {}]
  %s2 = inlined_call_operand.vmem [shape: f32[64,1], index: 2, kind: input, shape index: {}]
  %s3 = inlined_call_operand.vmem [shape: bf16[64,64], index: 3, kind: input, shape index: {}]
  %s4 = inlined_call_operand.vmem [shape: f32[64,1], index: 4, kind: input, shape index: {}]
  %s5 = inlined_call_operand.vmem [shape: f32[64,1], index: 5, kind: input, shape index: {}]
  %s6 = inlined_call_operand.<no memory space> [shape: f32[1], index: 6, kind: input, shape index: {}]
  %s7 = inlined_call_operand.hbm [shape: f32[1,128], index: 7, kind: output, shape index: {}]
  %s8 = sld [smem:[#allocation0]]
  $region38: #{tpu_custom_call.1} parent=0
    _
  %s10 = ssub.s32 1, %s8
  %s11 = scalar_select 0, %s10, %s8
  %12 = sst [smem:[#allocation2]] %s6
  $region1: #{tpu_custom_call.1} parent=0
    #allocation3 [shape = 'u8[512]{0}', space=vmem, size = 0x400, scoped, tag = 'output window, operand 0, single buffered']
    #allocation4 [shape = 's32[1]{0}', space=sflag, size = 0x4, scoped, tag = 'scoped memory for tpu_custom_call.1']
    %13 = vsyncpa [#allocation4], 0
    // Predicated region
    $region2: #{tpu_custom_call.1} parent=1 // pred_check
      _
    $region3: #{tpu_custom_call.1} parent=1 // pred_check_branch
      %15 = sbr.rel (0) target = $region5
    $region4: #{tpu_custom_call.1} parent=1 // pred_region
      _
    $region5: #{tpu_custom_call.1} parent=1 // pred_fallthru
      _
    // Predicated region
    $region6: #{tpu_custom_call.1} parent=1 // pred_check
      _
    $region7: #{tpu_custom_call.1} parent=1 // pred_check_branch
      %17 = sbr.rel (0) target = $region9
    $region8: #{tpu_custom_call.1} parent=1 // pred_region
      _
    $region9: #{tpu_custom_call.1} parent=1 // pred_fallthru
      _
    // Predicated region
    $region10: #{tpu_custom_call.1} parent=1 // pred_check
      _
    $region11: #{tpu_custom_call.1} parent=1 // pred_check_branch
      %19 = sbr.rel (0) target = $region13
    $region12: #{tpu_custom_call.1} parent=1 // pred_region
      _
    $region13: #{tpu_custom_call.1} parent=1 // pred_fallthru
      _
    // Predicated region
    $region14: #{tpu_custom_call.1} parent=1 // pred_check
      _
    $region15: #{tpu_custom_call.1} parent=1 // pred_check_branch
      %21 = sbr.rel (0) target = $region17
    $region16: #{tpu_custom_call.1} parent=1 // pred_region
      _
    $region17: #{tpu_custom_call.1} parent=1 // pred_fallthru
      _
    // Predicated region
    $region18: #{tpu_custom_call.1} parent=1 // pred_check
      _
    $region19: #{tpu_custom_call.1} parent=1 // pred_check_branch
      %23 = sbr.rel (0) target = $region21
    $region20: #{tpu_custom_call.1} parent=1 // pred_region
      _
    $region21: #{tpu_custom_call.1} parent=1 // pred_fallthru
      _
    // Predicated region
    $region22: #{tpu_custom_call.1} parent=1 // pred_check
      _
    $region23: #{tpu_custom_call.1} parent=1 // pred_check_branch
      %25 = sbr.rel (0) target = $region25
    $region24: #{tpu_custom_call.1} parent=1 // pred_region
      _
    $region25: #{tpu_custom_call.1} parent=1 // pred_fallthru
      _
    // Predicated region
    $region26: #{tpu_custom_call.1} parent=1 // pred_check
      _
    $region27: #{tpu_custom_call.1} parent=1 // pred_check_branch
      %27 = sbr.rel (0) target = $region29
    $region28: #{tpu_custom_call.1} parent=1 // pred_region
      _
    $region29: #{tpu_custom_call.1} parent=1 // pred_fallthru
      _
    %v29 = vld [vmem:[%s0] sm:$0x7]
    %v30 = vld [vmem:[%s1] sm:$0xff]
    %v31 = vld [vmem:[%s1 + $0x8] sm:$0xff]
    %v32 = vld [vmem:[%s1 + $0x10] sm:$0xff]
    %v33 = vld [vmem:[%s1 + $0x18] sm:$0xff]
    %v34 = vld [vmem:[%s1 + $0x20] sm:$0xff]
    %v35 = vld [vmem:[%s1 + $0x28] sm:$0xff]
    %v36 = vld [vmem:[%s1 + $0x30] sm:$0xff]
    %v37 = vld [vmem:[%s1 + $0x38] sm:$0xff]
    %39 = vset.pattern.permute.xlu0 0
    %40 = vperm.xlu0 %39, %v30
    %v41 = vpop.permute.xlu0 %40
    %44 = vset.pattern.permute.xlu0 0
    %45 = vperm.xlu0 %44, %v31
    %v46 = vpop.permute.xlu0 %45
    %49 = vset.pattern.permute.xlu0 0
    %50 = vperm.xlu0 %49, %v32
    %v51 = vpop.permute.xlu0 %50
    %54 = vset.pattern.permute.xlu0 0
    %55 = vperm.xlu0 %54, %v33
    %v56 = vpop.permute.xlu0 %55
    %59 = vset.pattern.permute.xlu0 0
    %60 = vperm.xlu0 %59, %v34
    %v61 = vpop.permute.xlu0 %60
    %64 = vset.pattern.permute.xlu0 0
    %65 = vperm.xlu0 %64, %v35
    %v66 = vpop.permute.xlu0 %65
    %69 = vset.pattern.permute.xlu0 0
    %70 = vperm.xlu0 %69, %v36
    %v71 = vpop.permute.xlu0 %70
    %74 = vset.pattern.permute.xlu0 0
    %75 = vperm.xlu0 %74, %v37
    %v76 = vpop.permute.xlu0 %75
    %v78 = vperm.slane %v29, 0
    %v79 = vmul.f32 %v41, %v78
    %v80 = vmul.f32 %v46, %v78
    %v81 = vmul.f32 %v51, %v78
    %v82 = vmul.f32 %v56, %v78
    %v83 = vmul.f32 %v61, %v78
    %v84 = vmul.f32 %v66, %v78
    %v85 = vmul.f32 %v71, %v78
    %v86 = vmul.f32 %v76, %v78
    %87 = vset.pattern.permute.xlu0 1
    %88 = vperm.xlu0 %87, %v30
    %v89 = vpop.permute.xlu0 %88
    %91 = vset.pattern.permute.xlu0 1
    %92 = vperm.xlu0 %91, %v31
    %v93 = vpop.permute.xlu0 %92
    %95 = vset.pattern.permute.xlu0 1
    %96 = vperm.xlu0 %95, %v32
    %v97 = vpop.permute.xlu0 %96
    %99 = vset.pattern.permute.xlu0 1
    %100 = vperm.xlu0 %99, %v33
    %v101 = vpop.permute.xlu0 %100
    %103 = vset.pattern.permute.xlu0 1
    %104 = vperm.xlu0 %103, %v34
    %v105 = vpop.permute.xlu0 %104
    %107 = vset.pattern.permute.xlu0 1
    %108 = vperm.xlu0 %107, %v35
    %v109 = vpop.permute.xlu0 %108
    %111 = vset.pattern.permute.xlu0 1
    %112 = vperm.xlu0 %111, %v36
    %v113 = vpop.permute.xlu0 %112
    %115 = vset.pattern.permute.xlu0 1
    %116 = vperm.xlu0 %115, %v37
    %v117 = vpop.permute.xlu0 %116
    %v119 = vperm.slane %v29, 1
    %v120 = vmul.f32 %v89, %v119
    %v121 = vmul.f32 %v93, %v119
    %v122 = vmul.f32 %v97, %v119
    %v123 = vmul.f32 %v101, %v119
    %v124 = vmul.f32 %v105, %v119
    %v125 = vmul.f32 %v109, %v119
    %v126 = vmul.f32 %v113, %v119
    %v127 = vmul.f32 %v117, %v119
    %v128 = vadd.f32 %v79, %v120
    %v129 = vadd.f32 %v80, %v121
    %v130 = vadd.f32 %v81, %v122
    %v131 = vadd.f32 %v82, %v123
    %v132 = vadd.f32 %v83, %v124
    %v133 = vadd.f32 %v84, %v125
    %v134 = vadd.f32 %v85, %v126
    %v135 = vadd.f32 %v86, %v127
    %136 = vset.pattern.permute.xlu0 2
    %137 = vperm.xlu0 %136, %v30
    %v138 = vpop.permute.xlu0 %137
    %140 = vset.pattern.permute.xlu0 2
    %141 = vperm.xlu0 %140, %v31
    %v142 = vpop.permute.xlu0 %141
    %144 = vset.pattern.permute.xlu0 2
    %145 = vperm.xlu0 %144, %v32
    %v146 = vpop.permute.xlu0 %145
    %148 = vset.pattern.permute.xlu0 2
    %149 = vperm.xlu0 %148, %v33
    %v150 = vpop.permute.xlu0 %149
    %152 = vset.pattern.permute.xlu0 2
    %153 = vperm.xlu0 %152, %v34
    %v154 = vpop.permute.xlu0 %153
    %156 = vset.pattern.permute.xlu0 2
    %157 = vperm.xlu0 %156, %v35
    %v158 = vpop.permute.xlu0 %157
    %160 = vset.pattern.permute.xlu0 2
    %161 = vperm.xlu0 %160, %v36
    %v162 = vpop.permute.xlu0 %161
    %164 = vset.pattern.permute.xlu0 2
    %165 = vperm.xlu0 %164, %v37
    %v166 = vpop.permute.xlu0 %165
    %v168 = vperm.slane %v29, 2
    %v169 = vmul.f32 %v138, %v168
    %v170 = vmul.f32 %v142, %v168
    %v171 = vmul.f32 %v146, %v168
    %v172 = vmul.f32 %v150, %v168
    %v173 = vmul.f32 %v154, %v168
    %v174 = vmul.f32 %v158, %v168
    %v175 = vmul.f32 %v162, %v168
    %v176 = vmul.f32 %v166, %v168
    %v177 = vadd.f32 %v128, %v169
    %v178 = vadd.f32 %v129, %v170
    %v179 = vadd.f32 %v130, %v171
    %v180 = vadd.f32 %v131, %v172
    %v181 = vadd.f32 %v132, %v173
    %v182 = vadd.f32 %v133, %v174
    %v183 = vadd.f32 %v134, %v175
    %v184 = vadd.f32 %v135, %v176
    %v185 = vld [vmem:[%s2] sm:$0xff]
    %v186 = vld [vmem:[%s2 + $0x8] sm:$0xff]
    %v187 = vld [vmem:[%s2 + $0x10] sm:$0xff]
    %v188 = vld [vmem:[%s2 + $0x18] sm:$0xff]
    %v189 = vld [vmem:[%s2 + $0x20] sm:$0xff]
    %v190 = vld [vmem:[%s2 + $0x28] sm:$0xff]
    %v191 = vld [vmem:[%s2 + $0x30] sm:$0xff]
    %v192 = vld [vmem:[%s2 + $0x38] sm:$0xff]
    %194 = vset.pattern.permute.xlu0 0
    %195 = vperm.xlu0 %194, %v185
    %v196 = vpop.permute.xlu0 %195
    %199 = vset.pattern.permute.xlu0 0
    %200 = vperm.xlu0 %199, %v186
    %v201 = vpop.permute.xlu0 %200
    %204 = vset.pattern.permute.xlu0 0
    %205 = vperm.xlu0 %204, %v187
    %v206 = vpop.permute.xlu0 %205
    %209 = vset.pattern.permute.xlu0 0
    %210 = vperm.xlu0 %209, %v188
    %v211 = vpop.permute.xlu0 %210
    %214 = vset.pattern.permute.xlu0 0
    %215 = vperm.xlu0 %214, %v189
    %v216 = vpop.permute.xlu0 %215
    %219 = vset.pattern.permute.xlu0 0
    %220 = vperm.xlu0 %219, %v190
    %v221 = vpop.permute.xlu0 %220
    %224 = vset.pattern.permute.xlu0 0
    %225 = vperm.xlu0 %224, %v191
    %v226 = vpop.permute.xlu0 %225
    %229 = vset.pattern.permute.xlu0 0
    %230 = vperm.xlu0 %229, %v192
    %v231 = vpop.permute.xlu0 %230
    %v233 = vadd.f32 %v177, %v196
    %v234 = vadd.f32 %v178, %v201
    %v235 = vadd.f32 %v179, %v206
    %v236 = vadd.f32 %v180, %v211
    %v237 = vadd.f32 %v181, %v216
    %v238 = vadd.f32 %v182, %v221
    %v239 = vadd.f32 %v183, %v226
    %v240 = vadd.f32 %v184, %v231
    %v241 = vmax.f32 %v233, 0.0
    %v242 = vmax.f32 %v234, 0.0
    %v243 = vmax.f32 %v235, 0.0
    %v244 = vmax.f32 %v236, 0.0
    %v245 = vmax.f32 %v237, 0.0
    %v246 = vmax.f32 %v238, 0.0
    %v247 = vmax.f32 %v239, 0.0
    %v248 = vmax.f32 %v240, 0.0
    %v249 = vld [vmem:[%s3] sm:$0xf]
    %v250 = vld [vmem:[%s3 + $0x4] sm:$0xf]
    %v251 = vld [vmem:[%s3 + $0x8] sm:$0xf]
    %v252 = vld [vmem:[%s3 + $0xc] sm:$0xf]
    %v253 = vld [vmem:[%s3 + $0x10] sm:$0xf]
    %v254 = vld [vmem:[%s3 + $0x14] sm:$0xf]
    %v255 = vld [vmem:[%s3 + $0x18] sm:$0xf]
    %v256 = vld [vmem:[%s3 + $0x1c] sm:$0xf]
    %v257 = vpack.c.bf16 %v242, %v241
    %v258 = vpack.c.bf16 %v244, %v243
    %v259 = vpack.c.bf16 %v246, %v245
    %v260 = vpack.c.bf16 %v248, %v247
    %v261 = vld [vmem:[%s4] sm:$0xff]
    %v262 = vld [vmem:[%s4 + $0x8] sm:$0xff]
    %v263 = vld [vmem:[%s4 + $0x10] sm:$0xff]
    %v264 = vld [vmem:[%s4 + $0x18] sm:$0xff]
    %v265 = vld [vmem:[%s4 + $0x20] sm:$0xff]
    %v266 = vld [vmem:[%s4 + $0x28] sm:$0xff]
    %v267 = vld [vmem:[%s4 + $0x30] sm:$0xff]
    %v268 = vld [vmem:[%s4 + $0x38] sm:$0xff]
    %270 = vset.pattern.permute.xlu0 0
    %271 = vperm.xlu0 %270, %v261
    %v272 = vpop.permute.xlu0 %271
    %275 = vset.pattern.permute.xlu0 0
    %276 = vperm.xlu0 %275, %v262
    %v277 = vpop.permute.xlu0 %276
    %280 = vset.pattern.permute.xlu0 0
    %281 = vperm.xlu0 %280, %v263
    %v282 = vpop.permute.xlu0 %281
    %285 = vset.pattern.permute.xlu0 0
    %286 = vperm.xlu0 %285, %v264
    %v287 = vpop.permute.xlu0 %286
    %290 = vset.pattern.permute.xlu0 0
    %291 = vperm.xlu0 %290, %v265
    %v292 = vpop.permute.xlu0 %291
    %295 = vset.pattern.permute.xlu0 0
    %296 = vperm.xlu0 %295, %v266
    %v297 = vpop.permute.xlu0 %296
    %300 = vset.pattern.permute.xlu0 0
    %301 = vperm.xlu0 %300, %v267
    %v302 = vpop.permute.xlu0 %301
    %305 = vset.pattern.permute.xlu0 0
    %306 = vperm.xlu0 %305, %v268
    %v307 = vpop.permute.xlu0 %306
    %v317 = vunpack.c.l.b16 %v249
    %v318 = vunpack.c.l.b16 %v250
    %v319 = vunpack.c.l.b16 %v251
    %v320 = vunpack.c.l.b16 %v252
    %v321 = vunpack.c.l.b16 %v253
    %v322 = vunpack.c.l.b16 %v254
    %v323 = vunpack.c.l.b16 %v255
    %v324 = vunpack.c.l.b16 %v256
    %v325 = vpack.c.b16 %v318, %v317
    %v326 = vpack.c.b16 %v320, %v319
    %v327 = vpack.c.b16 %v322, %v321
    %v328 = vpack.c.b16 %v324, %v323
    %vm329 = vcmask 523264
    %v331 = vsel %vm329, %v325, 0
    %v334 = vsel %vm329, %v326, 0
    %v337 = vsel %vm329, %v327, 0
    %v340 = vsel %vm329, %v328, 0
    %342 = vmatpush.bf16.msra.mxu0 0
    %343 = vmatpush.bf16.msra.mxu0 0
    %344 = vmatpush.bf16.msra.mxu0 0
    %345 = vmatpush.bf16.msra.mxu0 0
    %346 = vmatpush.bf16.msra.mxu0 %v260
    %347 = vmatpush.bf16.msra.mxu0 %v259
    %348 = vmatpush.bf16.msra.mxu0 %v258
    %349 = vmatpush.bf16.msra.mxu0 %v257
    %350 = vmatmul.bf16.gmra.mxu0 %v331
    %v351 = vpop.f32.mrf.mxu0
    %v352 = vadd.f32 %v272, %v351
    %v353 = vpop.f32.mrf.mxu0
    %v354 = vadd.f32 %v277, %v353
    %355 = vmatmul.bf16.gmra.mxu0 %v334
    %v356 = vpop.f32.mrf.mxu0
    %v357 = vadd.f32 %v282, %v356
    %v358 = vpop.f32.mrf.mxu0
    %v359 = vadd.f32 %v287, %v358
    %360 = vmatmul.bf16.gmra.mxu0 %v337
    %v361 = vpop.f32.mrf.mxu0
    %v362 = vadd.f32 %v292, %v361
    %v363 = vpop.f32.mrf.mxu0
    %v364 = vadd.f32 %v297, %v363
    %365 = vmatmul.bf16.gmra.mxu0 %v340
    %v366 = vpop.f32.mrf.mxu0
    %v367 = vadd.f32 %v302, %v366
    %v368 = vpop.f32.mrf.mxu0
    %v369 = vadd.f32 %v307, %v368
    %370 = vdwg.mxu0
    %v371 = vmax.f32 %v352, 0.0
    %v372 = vmax.f32 %v354, 0.0
    %v373 = vmax.f32 %v357, 0.0
    %v374 = vmax.f32 %v359, 0.0
    %v375 = vmax.f32 %v362, 0.0
    %v376 = vmax.f32 %v364, 0.0
    %v377 = vmax.f32 %v367, 0.0
    %v378 = vmax.f32 %v369, 0.0
    %v379 = vld [vmem:[%s5] sm:$0xff]
    %v380 = vld [vmem:[%s5 + $0x8] sm:$0xff]
    %v381 = vld [vmem:[%s5 + $0x10] sm:$0xff]
    %v382 = vld [vmem:[%s5 + $0x18] sm:$0xff]
    %v383 = vld [vmem:[%s5 + $0x20] sm:$0xff]
    %v384 = vld [vmem:[%s5 + $0x28] sm:$0xff]
    %v385 = vld [vmem:[%s5 + $0x30] sm:$0xff]
    %v386 = vld [vmem:[%s5 + $0x38] sm:$0xff]
    %388 = vset.pattern.permute.xlu0 0
    %389 = vperm.xlu0 %388, %v379
    %v390 = vpop.permute.xlu0 %389
    %393 = vset.pattern.permute.xlu0 0
    %394 = vperm.xlu0 %393, %v380
    %v395 = vpop.permute.xlu0 %394
    %398 = vset.pattern.permute.xlu0 0
    %399 = vperm.xlu0 %398, %v381
    %v400 = vpop.permute.xlu0 %399
    %403 = vset.pattern.permute.xlu0 0
    %404 = vperm.xlu0 %403, %v382
    %v405 = vpop.permute.xlu0 %404
    %408 = vset.pattern.permute.xlu0 0
    %409 = vperm.xlu0 %408, %v383
    %v410 = vpop.permute.xlu0 %409
    %413 = vset.pattern.permute.xlu0 0
    %414 = vperm.xlu0 %413, %v384
    %v415 = vpop.permute.xlu0 %414
    %418 = vset.pattern.permute.xlu0 0
    %419 = vperm.xlu0 %418, %v385
    %v420 = vpop.permute.xlu0 %419
    %423 = vset.pattern.permute.xlu0 0
    %424 = vperm.xlu0 %423, %v386
    %v425 = vpop.permute.xlu0 %424
    %v427 = vmul.f32 %v371, %v390
    %v428 = vmul.f32 %v372, %v395
    %v429 = vmul.f32 %v373, %v400
    %v430 = vmul.f32 %v374, %v405
    %v431 = vmul.f32 %v375, %v410
    %v432 = vmul.f32 %v376, %v415
    %v433 = vmul.f32 %v377, %v420
    %v434 = vmul.f32 %v378, %v425
    %v435 = vadd.f32 %v427, %v428
    %v436 = vadd.f32 %v435, %v429
    %v437 = vadd.f32 %v436, %v430
    %v438 = vadd.f32 %v437, %v431
    %v439 = vadd.f32 %v438, %v432
    %v440 = vadd.f32 %v439, %v433
    %v441 = vadd.f32 %v440, %v434
    %v442 = vrot.slane %v441, 4
    %v443 = vadd.f32 %v441, %v442
    %v444 = vrot.slane %v443, 2
    %v445 = vadd.f32 %v443, %v444
    %v446 = vrot.slane %v445, 1
    %v447 = vadd.f32 %v445, %v446
    %s448 = sld [smem:[#allocation2]]
    %v449 = vstv %s448
    %v450 = vadd.f32 %v447, %v449
    %451 = vst [vmem:[#allocation3] sm:$0x1] %v450
    // Predicated region
    $region30: #{tpu_custom_call.1} parent=1 // pred_check
      _
    $region31: #{tpu_custom_call.1} parent=1 // pred_check_branch
      %453 = sbr.rel (0) target = $region33
    $region32: #{tpu_custom_call.1} parent=1 // pred_region
      %455 = vsyncadd [#allocation4], 0
      %s457 = sshll.u32 [#allocation3], 4
      %s458 = int_to_ptr.vmem [resolvable:$true] %s457
      %s459 = sshll.u32 %s7, 4
      %s460 = int_to_ptr.hbm [resolvable:$true] %s459
      %462 = dma.vmem_to_hbm [thread:$0]  %s458, 16, %s460, [#allocation4]
    $region33: #{tpu_custom_call.1} parent=1 // pred_fallthru
      _
    // Predicated region
    $region34: #{tpu_custom_call.1} parent=1 // pred_check
      _
    $region35: #{tpu_custom_call.1} parent=1 // pred_check_branch
      %464 = sbr.rel (0) target = $region37
    $region36: #{tpu_custom_call.1} parent=1 // pred_region
      %466 = dma.done [#allocation4], 16
    $region37: #{tpu_custom_call.1} parent=1 // pred_fallthru
      _
    %467 = vsyncpa [#allocation4], 1

</llo_original>
